<compile_context>
chip_gen: v7x
topology: tpu7x:2x2x1
jax: 0.10.0
libtpu: 0.0.40
codegen_flags: <defaults>
</compile_context>

<pallas_src>
import jax
import jax.numpy as jnp
from jax.experimental import pallas as pl
from jax.experimental.pallas import tpu as pltpu

_F32_EPS = 1.1920929e-07  # torch.finfo(torch.float32).eps
_LANES = 128


def _round_up(a, b):
    return (a + b - 1) // b * b


# ----------------------------- kernel math ---------------------------------

def _weighted_bce_rows(x, y, g, w0, w1):
    """Weighted one-bin BCE on lane-dense (TR, 128) blocks."""
    c = jnp.cos(g)
    s = jnp.sin(g)
    z0 = c * x - s * y          # rotation row 0 (the torch.bmm), elementwise
    z1 = s * x + c * y          # rotation row 1

    # BCE with logits + torch's log-clamp(-100) parity:
    #   -log sigmoid(z)      = softplus(-z) = max(-z,0) + log1p(exp(-|z|))
    #   -log(1 - sigmoid(z)) = softplus( z) = max( z,0) + log1p(exp(-|z|))
    a0 = jnp.log1p(jnp.exp(-jnp.abs(z0)))
    nlogp0 = jnp.minimum(jnp.maximum(-z0, 0.0) + a0, 100.0)   # -log p0  (clamped)
    nlog1mp0 = jnp.minimum(jnp.maximum(z0, 0.0) + a0, 100.0)  # -log(1-p0) (clamped)
    loss0 = 0.5 * (nlogp0 + nlog1mp0)                          # target 0.5

    a1 = jnp.log1p(jnp.exp(-jnp.abs(z1)))
    loss1 = jnp.minimum(jnp.maximum(-z1, 0.0) + a1, 100.0)     # target 1.0

    return w0 * loss0, w1 * loss1


def _onebin_reduce_kernel(s_ref, part_ref):
    """'mean'/'sum' path: emit an (8,128) lane-dense partial sum per tile."""
    wl0, wl1 = _weighted_bce_rows(s_ref[0], s_ref[1], s_ref[2],
                                  s_ref[3], s_ref[4])
    wl = wl0 + wl1                           # (TR, 128)
    tr = wl.shape[0]
    acc = wl[0:8, :]                         # vreg-sized accumulator
    for k in range(1, tr // 8):              # static, unrolled VPU adds
        acc = acc + wl[8 * k:8 * (k + 1), :]
    part_ref[0] = acc                        # block (1, 8, 128)


def _onebin_none_kernel(s_ref, l0_ref, l1_ref):
    """'none' path: write the weighted elementwise loss (planar columns)."""
    wl0, wl1 = _weighted_bce_rows(s_ref[0], s_ref[1], s_ref[2],
                                  s_ref[3], s_ref[4])
    l0_ref[...] = wl0
    l1_ref[...] = wl1


# ------------------------------- wrapper ------------------------------------

def _repack(pred, target, weight, tile_rows):
    """Pack into one lane-dense (5, rows, 128) slab, zero-weight padded."""
    n = pred.shape[0]
    pred = jnp.asarray(pred, jnp.float32)
    g = jnp.asarray(target, jnp.float32).reshape(n)
    w = jnp.broadcast_to(jnp.asarray(weight, jnp.float32), (n, 2))

    rows = max(-(-n // _LANES), 1)
    rows = _round_up(rows, 8)
    tr = min(rows, max(8, (int(tile_rows) // 8) * 8))
    rows = _round_up(rows, tr)
    npad = rows * _LANES
    pad = npad - n

    # TODO(synk): the column de-interleave of pred/weight happens here in XLA;
    # fusing it into the upstream producer (emit planar x/y, w0/w1 directly)
    # would remove this extra HBM pass.
    stacked = jnp.stack([pred[:, 0], pred[:, 1], g, w[:, 0], w[:, 1]], axis=0)
    stacked = jnp.pad(stacked, ((0, 0), (0, pad))).reshape(5, rows, _LANES)
    return stacked, rows, tr, n


def onebin_loss_pallas(pred, target, weight, avg_factor,
                       reduction='mean', loss_weight=1.0,
                       reduction_override=None, tile_rows=1024):
    """Equivalent of OneBinLoss(reduction, loss_weight).forward(...)."""
    assert reduction_override in (None, 'none', 'mean', 'sum')
    reduction = reduction_override if reduction_override else reduction

    streams, rows, tr, n = _repack(pred, target, weight, tile_rows)
    ntiles = rows // tr
    npad = rows * _LANES
    in_specs = [pl.BlockSpec((5, tr, _LANES), lambda i: (0, i, 0))]
    cparams = pltpu.CompilerParams(dimension_semantics=("parallel",))

    if reduction in ('mean', 'sum'):
        # Reduction-only variant: no elementwise writeback, just lane-dense
        # per-tile partial sums (one (8,128) slab per grid step).
        partials = pl.pallas_call(
            _onebin_reduce_kernel,
            out_shape=jax.ShapeDtypeStruct((ntiles, 8, _LANES), jnp.float32),
            grid=(ntiles,),
            in_specs=in_specs,
            out_specs=pl.BlockSpec((1, 8, _LANES), lambda i: (i, 0, 0)),
            compiler_params=cparams,
            cost_estimate=pl.CostEstimate(
                flops=16 * npad,
                transcendentals=6 * npad,
                bytes_accessed=4 * (5 * npad + ntiles * 8 * _LANES)),
        )(streams)
        total = jnp.sum(partials)

        if avg_factor is None:
            out = total / jnp.float32(2 * n) if reduction == 'mean' else total
        else:
            if reduction == 'mean':
                out = total / (jnp.float32(avg_factor) + _F32_EPS)
            else:
                raise ValueError('avg_factor can not be used with reduction="sum"')
        return loss_weight * out

    # reduction == 'none': elementwise weighted loss, shape (N, 2)
    l0, l1 = pl.pallas_call(
        _onebin_none_kernel,
        out_shape=(jax.ShapeDtypeStruct((rows, _LANES), jnp.float32),
                   jax.ShapeDtypeStruct((rows, _LANES), jnp.float32)),
        grid=(ntiles,),
        in_specs=in_specs,
        out_specs=(pl.BlockSpec((tr, _LANES), lambda i: (i, 0)),
                   pl.BlockSpec((tr, _LANES), lambda i: (i, 0))),
        compiler_params=cparams,
        cost_estimate=pl.CostEstimate(
            flops=16 * npad,
            transcendentals=6 * npad,
            bytes_accessed=4 * 7 * npad),
    )(streams)
    loss_elem = jnp.stack([l0.reshape(-1)[:n], l1.reshape(-1)[:n]], axis=1)
    return loss_weight * loss_elem


# ------------------------------ references ----------------------------------

def _reference_elem(pred, target, weight):
    """Pure-JAX torch-faithful weighted elementwise loss (sigmoid+log+clamp)."""
    pred = jnp.asarray(pred, jnp.float32)
    gg = jnp.asarray(target, jnp.float32).reshape(-1, 1)
    c, s = jnp.cos(gg), jnp.sin(gg)
    z = jnp.concatenate([c * pred[:, :1] - s * pred[:, 1:2],
                         s * pred[:, :1] + c * pred[:, 1:2]], axis=1)
    p = jax.nn.sigmoid(z)
    t = jnp.broadcast_to(jnp.array([[0.5, 1.0]], jnp.float32), pred.shape)
    loss = -(t * jnp.maximum(jnp.log(p), -100.0)
             + (1.0 - t) * jnp.maximum(jnp.log(1.0 - p), -100.0))
    return loss * jnp.broadcast_to(jnp.asarray(weight, jnp.float32), loss.shape)


def _reference_mean(pred, target, weight, avg_factor, loss_weight=1.0):
    return loss_weight * _reference_elem(pred, target, weight).sum() / (avg_factor + _F32_EPS)


# --------------------------------- demo --------------------------------------

if __name__ == "__main__":
    key = jax.random.PRNGKey(0)
    k1, k2, k3, k4, k5, k6 = jax.random.split(key, 6)

    # Small, not a multiple of 128 -> exercises the zero-weight padding.
    N = 300
    pred = jax.random.normal(k1, (N, 2), dtype=jnp.float32)
    target = jax.random.uniform(k2, (N, 1), dtype=jnp.float32,
                                minval=-3.14, maxval=3.14)
    weight = jax.random.uniform(k3, (N, 2), dtype=jnp.float32)
    avg_factor = float(N)

    # 'mean' + avg_factor (OneBinLoss defaults)
    out = jax.block_until_ready(
        onebin_loss_pallas(pred, target, weight, avg_factor, reduction='mean'))
    ref = jax.block_until_ready(_reference_mean(pred, target, weight, avg_factor))
    assert jnp.allclose(out, ref, rtol=1e-4, atol=1e-5), (out, ref)

    # 'sum' (no avg_factor)
    out_sum = jax.block_until_ready(
        onebin_loss_pallas(pred, target, weight, None, reduction='sum'))
    ref_sum = jax.block_until_ready(_reference_elem(pred, target, weight).sum())
    assert jnp.allclose(out_sum, ref_sum, rtol=1e-4, atol=1e-4), (out_sum, ref_sum)

    # 'none' override -> weighted elementwise (N, 2)
    out_none = jax.block_until_ready(
        onebin_loss_pallas(pred, target, weight, avg_factor,
                           reduction='mean', reduction_override='none'))
    ref_none = jax.block_until_ready(_reference_elem(pred, target, weight))
    assert out_none.shape == (N, 2)
    assert jnp.allclose(out_none, ref_none, rtol=1e-4, atol=1e-5)

    # Multi-tile grid path (tiny tile_rows just to exercise the pipeline).
    N2 = 2500
    pred2 = jax.random.normal(k4, (N2, 2), dtype=jnp.float32)
    target2 = jax.random.uniform(k5, (N2, 1), dtype=jnp.float32,
                                 minval=-3.14, maxval=3.14)
    weight2 = jax.random.uniform(k6, (N2, 2), dtype=jnp.float32)
    out2 = jax.block_until_ready(
        onebin_loss_pallas(pred2, target2, weight2, float(N2),
                           reduction='mean', tile_rows=8))
    ref2 = jax.block_until_ready(_reference_mean(pred2, target2, weight2, float(N2)))
    assert jnp.allclose(out2, ref2, rtol=1e-4, atol=1e-5), (out2, ref2)

    print("KERNEL_OK")
</pallas_src>

<mosaic_0001>
module attributes {stable_mosaic.version = 11 : i64} {
  func.func @_onebin_reduce_kernel(%arg0: i32, %arg1: memref<5x8x128xf32, #tpu.memory_space<vmem>>, %arg2: memref<1x8x128xf32, #tpu.memory_space<vmem>>) attributes {dimension_semantics = [#tpu.dimension_semantics<parallel>], iteration_bounds = array<i64: 1>, scalar_prefetch = 0 : i64, scratch_operands = 0 : i64, tpu.core_type = #tpu.core_type<tc>, window_params = [{transform_indices = @transform_0, window_bounds = array<i64: 5, 8, 128>}, {transform_indices = @transform_1, window_bounds = array<i64: 1, 8, 128>}]} {
    %c0 = arith.constant 0 : index
    %c0_0 = arith.constant 0 : index
    %c0_1 = arith.constant 0 : index
    %0 = vector.load %arg1[%c0, %c0_0, %c0_1] : memref<5x8x128xf32, #tpu.memory_space<vmem>>, vector<1x8x128xf32>
    %1 = vector.shape_cast %0 : vector<1x8x128xf32> to vector<8x128xf32>
    %c1 = arith.constant 1 : index
    %c0_2 = arith.constant 0 : index
    %c0_3 = arith.constant 0 : index
    %2 = vector.load %arg1[%c1, %c0_2, %c0_3] : memref<5x8x128xf32, #tpu.memory_space<vmem>>, vector<1x8x128xf32>
    %3 = vector.shape_cast %2 : vector<1x8x128xf32> to vector<8x128xf32>
    %c2 = arith.constant 2 : index
    %c0_4 = arith.constant 0 : index
    %c0_5 = arith.constant 0 : index
    %4 = vector.load %arg1[%c2, %c0_4, %c0_5] : memref<5x8x128xf32, #tpu.memory_space<vmem>>, vector<1x8x128xf32>
    %5 = vector.shape_cast %4 : vector<1x8x128xf32> to vector<8x128xf32>
    %c3 = arith.constant 3 : index
    %c0_6 = arith.constant 0 : index
    %c0_7 = arith.constant 0 : index
    %6 = vector.load %arg1[%c3, %c0_6, %c0_7] : memref<5x8x128xf32, #tpu.memory_space<vmem>>, vector<1x8x128xf32>
    %7 = vector.shape_cast %6 : vector<1x8x128xf32> to vector<8x128xf32>
    %c4 = arith.constant 4 : index
    %c0_8 = arith.constant 0 : index
    %c0_9 = arith.constant 0 : index
    %8 = vector.load %arg1[%c4, %c0_8, %c0_9] : memref<5x8x128xf32, #tpu.memory_space<vmem>>, vector<1x8x128xf32>
    %9 = vector.shape_cast %8 : vector<1x8x128xf32> to vector<8x128xf32>
    %10 = math.cos %5 : vector<8x128xf32>
    %11 = math.sin %5 : vector<8x128xf32>
    %12 = arith.mulf %10, %1 : vector<8x128xf32>
    %13 = arith.mulf %11, %3 : vector<8x128xf32>
    %14 = arith.subf %12, %13 : vector<8x128xf32>
    %15 = arith.mulf %11, %1 : vector<8x128xf32>
    %16 = arith.mulf %10, %3 : vector<8x128xf32>
    %17 = arith.addf %15, %16 : vector<8x128xf32>
    %18 = math.absf %14 : vector<8x128xf32>
    %cst = arith.constant 0.000000e+00 : f32
    %19 = vector.broadcast %cst : f32 to vector<8x128xf32>
    %20 = arith.subf %19, %18 : vector<8x128xf32>
    %21 = math.exp %20 : vector<8x128xf32>
    %22 = math.log1p %21 : vector<8x128xf32>
    %cst_10 = arith.constant 0.000000e+00 : f32
    %23 = vector.broadcast %cst_10 : f32 to vector<8x128xf32>
    %24 = arith.subf %23, %14 : vector<8x128xf32>
    %cst_11 = arith.constant 0.000000e+00 : f32
    %25 = vector.broadcast %cst_11 : f32 to vector<8x128xf32>
    %26 = arith.maximumf %24, %25 : vector<8x128xf32>
    %27 = arith.addf %26, %22 : vector<8x128xf32>
    %cst_12 = arith.constant 1.000000e+02 : f32
    %28 = vector.broadcast %cst_12 : f32 to vector<8x128xf32>
    %29 = arith.minimumf %27, %28 : vector<8x128xf32>
    %cst_13 = arith.constant 0.000000e+00 : f32
    %30 = vector.broadcast %cst_13 : f32 to vector<8x128xf32>
    %31 = arith.maximumf %14, %30 : vector<8x128xf32>
    %32 = arith.addf %31, %22 : vector<8x128xf32>
    %cst_14 = arith.constant 1.000000e+02 : f32
    %33 = vector.broadcast %cst_14 : f32 to vector<8x128xf32>
    %34 = arith.minimumf %32, %33 : vector<8x128xf32>
    %35 = arith.addf %29, %34 : vector<8x128xf32>
    %cst_15 = arith.constant 5.000000e-01 : f32
    %36 = vector.broadcast %cst_15 : f32 to vector<8x128xf32>
    %37 = arith.mulf %36, %35 : vector<8x128xf32>
    %38 = math.absf %17 : vector<8x128xf32>
    %cst_16 = arith.constant 0.000000e+00 : f32
    %39 = vector.broadcast %cst_16 : f32 to vector<8x128xf32>
    %40 = arith.subf %39, %38 : vector<8x128xf32>
    %41 = math.exp %40 : vector<8x128xf32>
    %42 = math.log1p %41 : vector<8x128xf32>
    %cst_17 = arith.constant 0.000000e+00 : f32
    %43 = vector.broadcast %cst_17 : f32 to vector<8x128xf32>
    %44 = arith.subf %43, %17 : vector<8x128xf32>
    %cst_18 = arith.constant 0.000000e+00 : f32
    %45 = vector.broadcast %cst_18 : f32 to vector<8x128xf32>
    %46 = arith.maximumf %44, %45 : vector<8x128xf32>
    %47 = arith.addf %46, %42 : vector<8x128xf32>
    %cst_19 = arith.constant 1.000000e+02 : f32
    %48 = vector.broadcast %cst_19 : f32 to vector<8x128xf32>
    %49 = arith.minimumf %47, %48 : vector<8x128xf32>
    %50 = arith.mulf %7, %37 : vector<8x128xf32>
    %51 = arith.mulf %9, %49 : vector<8x128xf32>
    %52 = arith.addf %50, %51 : vector<8x128xf32>
    %c0_20 = arith.constant 0 : index
    %c0_21 = arith.constant 0 : index
    %c0_22 = arith.constant 0 : index
    %53 = vector.load %arg2[%c0_20, %c0_21, %c0_22] : memref<1x8x128xf32, #tpu.memory_space<vmem>>, vector<1x8x128xf32>
    %54 = vector.shape_cast %53 : vector<1x8x128xf32> to vector<8x128xf32>
    %55 = vector.shape_cast %52 : vector<8x128xf32> to vector<1x8x128xf32>
    tpu.vector_store %arg2[%c0_20, %c0_21, %c0_22], %55 {strides = array<i32>} : memref<1x8x128xf32, #tpu.memory_space<vmem>>, vector<1x8x128xf32>,
    return
  }
  func.func @transform_0(%arg0: i32) -> (i32, i32, i32) {
    %c0_i32 = arith.constant 0 : i32
    %c0_i32_0 = arith.constant 0 : i32
    %c0_i32_1 = arith.constant 0 : i32
    return %c0_i32, %arg0, %c0_i32_0 : i32, i32, i32
  }
  func.func @transform_1(%arg0: i32) -> (i32, i32, i32) {
    %c0_i32 = arith.constant 0 : i32
    %c0_i32_0 = arith.constant 0 : i32
    %c0_i32_1 = arith.constant 0 : i32
    return %arg0, %c0_i32, %c0_i32_0 : i32, i32, i32
  }
}

</mosaic_0001>

<llo_original>
// kernel: tpu_custom_call.1
$region0: #{tpu_custom_call.1}
  #allocation0 [shape = 'u32[]', space=smem, size = 0x4, offset = 0x4, fixed_abs, tag = 'smem constant byte address 0x4 - core index']
  #allocation1 [shape = 'u32[144,128]{1,0:T(1,128)}', space=vmem, size = 0x12000, scoped, tag = 'internal scratch']
  %s0 = inlined_call_operand.hbm [shape: f32[5,8,128], index: 0, kind: input, shape index: {}]
  %s1 = inlined_call_operand.hbm [shape: f32[1,8,128], index: 1, kind: output, shape index: {}]
  %s2 = sld [smem:[#allocation0]]
  $region18: #{tpu_custom_call.1} parent=0
    _
  %s4 = ssub.s32 1, %s2
  %s5 = scalar_select 0, %s4, %s2
  $region1: #{tpu_custom_call.1} parent=0
    #allocation2 [shape = 'u8[20480]{0}', space=vmem, size = 0x5000, scoped, tag = 'input window, operand 0, single buffered']
    #allocation3 [shape = 's32[1]{0}', space=sflag, size = 0x4, scoped, tag = 'scoped memory for tpu_custom_call.1']
    #allocation4 [shape = 's32[1]{0}', space=sflag, size = 0x4, scoped, tag = 'scoped memory for tpu_custom_call.1']
    #allocation5 [shape = 'u8[4096]{0}', space=vmem, size = 0x1000, scoped, tag = 'output window, operand 0, single buffered']
    %6 = vsyncpa [#allocation3], 0
    %7 = vsyncpa [#allocation4], 0
    // Predicated region
    $region2: #{tpu_custom_call.1} parent=1 // pred_check
      _
    $region3: #{tpu_custom_call.1} parent=1 // pred_check_branch
      %9 = sbr.rel (0) target = $region5
    $region4: #{tpu_custom_call.1} parent=1 // pred_region
      %s11 = ssub.s32 640, 640
      %12 = vsyncadd [#allocation3], %s11
      %s13 = sshll.u32 [#allocation2], 4
      %s14 = int_to_ptr.vmem [resolvable:$true] %s13
      %19 = dma.hbm_to_vmem [thread:$0]  %s0, 640, %s14, [#allocation3], 128, 128, 8
    $region5: #{tpu_custom_call.1} parent=1 // pred_fallthru
      _
    // Predicated region
    $region6: #{tpu_custom_call.1} parent=1 // pred_check
      _
    $region7: #{tpu_custom_call.1} parent=1 // pred_check_branch
      %21 = sbr.rel (0) target = $region9
    $region8: #{tpu_custom_call.1} parent=1 // pred_region
      %22 = dma.done [#allocation3], 640
    $region9: #{tpu_custom_call.1} parent=1 // pred_fallthru
      _
    %v23 = vld [vmem:[#allocation2] sm:$0xff]
    %s24 = scalar_lea.vmem [#allocation2], 8
    %v25 = vld [vmem:[%s24] sm:$0xff]
    %s26 = scalar_lea.vmem [#allocation2], 16
    %v27 = vld [vmem:[%s26] sm:$0xff]
    %s28 = scalar_lea.vmem [#allocation2], 24
    %v29 = vld [vmem:[%s28] sm:$0xff]
    %s30 = scalar_lea.vmem [#allocation2], 32
    %v31 = vld [vmem:[%s30] sm:$0xff]
    %v32 = vand.u32 2147483647, %v27
    %vm33 = vcmp.le.f32.partialorder %v32, 0.7853982
    %vm34 = vcmp.lt.s32.totalorder %v27, 0
    %v35 = vand.u32 %v27, 2139095040
    %v36 = vshrl.u32 %v35, 23
    %v37 = vsub.s32 %v36, 127
    %v38 = vand.u32 2147483647, %v27
    %v39 = vand.u32 %v38, 8388607
    %v40 = vor.u32 %v39, 8388608
    %v41 = vsub.s32 0, %v40
    %v42 = vadd.s32 %v37, 1
    %vm43 = vcmp.gt.s32.totalorder %v42, 0
    %v44 = vsel %vm43, %v42, 0
    %v45 = vshrl.u32 %v44, 5
    %v46 = vand.u32 %v44, 31
    %v47 = vsub.s32 32, %v46
    %v48 = vshrl.u32 683565275, %v47
    %v49 = vshll.u32 683565275, %v46
    %v50 = vshrl.u32 2475754826, %v47
    %v51 = vor.u32 %v49, %v50
    %v52 = vshll.u32 2475754826, %v46
    %v53 = vshrl.u32 2131351028, %v47
    %v54 = vor.u32 %v52, %v53
    %v55 = vshll.u32 2131351028, %v46
    %v56 = vshrl.u32 2102212464, %v47
    %v57 = vor.u32 %v55, %v56
    %v58 = vshll.u32 2102212464, %v46
    %v59 = vshrl.u32 920167782, %v47
    %v60 = vor.u32 %v58, %v59
    %v61 = vshll.u32 920167782, %v46
    %v62 = vshrl.u32 1326507024, %v47
    %v63 = vor.u32 %v61, %v62
    %vm64 = vcmp.lt.s32.totalorder %v45, 1
    %vm65 = vcmp.lt.s32.totalorder %v45, 2
    %vm66 = vcmp.lt.s32.totalorder %v45, 3
    %vm67 = vcmp.lt.s32.totalorder %v45, 4
    %v68 = vsel %vm64, %v48, %v51
    %v69 = vsel %vm67, %v57, 2102212464
    %v70 = vsel %vm66, %v54, %v69
    %v71 = vsel %vm65, %v68, %v70
    %v72 = vsel %vm64, %v51, %v54
    %v73 = vsel %vm67, %v60, 920167782
    %v74 = vsel %vm66, %v57, %v73
    %v75 = vsel %vm65, %v72, %v74
    %v76 = vsel %vm64, %v54, %v57
    %v77 = vsel %vm67, %v63, 1326507024
    %v78 = vsel %vm66, %v60, %v77
    %v79 = vsel %vm65, %v76, %v78
    %v80 = vshll.u32 %v40, 8
    %v81 = vmul.u32.u64.compose %v80, %v79
    %v82 = vextract.low.u32 %v81
    %v83 = vextract.high.u32 %v81
    %v84 = vmul.u32.u64.compose %v80, %v75
    %v85 = vextract.low.u32 %v84
    %v86 = vextract.high.u32 %v84
    %v87 = vmul.u32 %v80, %v71
    %v88 = vadd.s32 %v83, %v85
    %vm89 = vc.u32 %v83, %v85
    %v90 = vadd.s32 %v86, 1
    %v91 = vsel %vm89, %v90, %v86
    %v92 = vadd.s32 %v87, %v91
    %v93 = vadd.s32 %v92, 536870912
    %v94 = vshrl.u32 %v93, 30
    %v95 = vshll.u32 %v94, 30
    %v96 = vsub.s32 %v92, %v95
    %vm97 = vcmp.lt.s32.totalorder %v96, 0
    %v98 = vsub.s32 0, %v96
    %v99 = vsel %vm97, %v98, %v96
    %v100 = vclz %v99
    %v101 = vsub.s32 %v100, 2
    %vm102 = vcmp.gt.s32.totalorder 0, %v101
    %v103 = vsel %vm102, 0, %v101
    %v104 = vsub.s32 32, %v103
    %v105 = vshll.u32 %v96, %v103
    %v106 = vshrl.u32 %v88, %v104
    %v107 = vor.u32 %v105, %v106
    %v108 = vsub.s32 4294967266, %v103
    %v109 = vadd.s32 %v108, 127
    %v110 = vshll.u32 %v109, 23
    %v111 = vor.u32 4788187, %v110
    %v112 = vand.u32 2147483647, %v111
    %v114 = vcvt.s32.f32 %v107
    %v115 = vmul.f32 %v114, %v112
    %v116 = vxor.u32 %v115, 2147483648
    %v117 = vsel %vm34, %v116, %v115
    %v118 = vsub.s32 4, %v94
    %v119 = vsel %vm34, %v118, %v94
    %v120 = vsel %vm33, %v27, %v117
    %v121 = vsel %vm33, 0, %v119
    %v122 = vcosq.f32.pop %v120
    %v123 = vsinq.f32.pop %v120
    %vm124 = vweird.f32 %v27
    %v125 = vand.u32 %v121, 3
    %vm126 = vcmp.lt.s32.totalorder %v125, 2
    %vm127 = vcmp.eq.s32.totalorder %v125, 0
    %v128 = vxor.u32 %v123, 2147483648
    %v129 = vsel %vm127, %v122, %v128
    %vm130 = vcmp.eq.s32.totalorder %v125, 2
    %v131 = vxor.u32 %v122, 2147483648
    %v132 = vsel %vm130, %v131, %v123
    %v133 = vsel %vm126, %v129, %v132
    %v134 = vsel %vm124, nan, %v133
    %v135 = vand.u32 2147483647, %v27
    %vm136 = vcmp.le.f32.partialorder %v135, 0.7853982
    %vm137 = vcmp.lt.s32.totalorder %v27, 0
    %v138 = vand.u32 %v27, 2139095040
    %v139 = vshrl.u32 %v138, 23
    %v140 = vsub.s32 %v139, 127
    %v141 = vand.u32 2147483647, %v27
    %v142 = vand.u32 %v141, 8388607
    %v143 = vor.u32 %v142, 8388608
    %v144 = vsub.s32 0, %v143
    %v145 = vadd.s32 %v140, 1
    %vm146 = vcmp.gt.s32.totalorder %v145, 0
    %v147 = vsel %vm146, %v145, 0
    %v148 = vshrl.u32 %v147, 5
    %v149 = vand.u32 %v147, 31
    %v150 = vsub.s32 32, %v149
    %v151 = vshrl.u32 683565275, %v150
    %v152 = vshll.u32 683565275, %v149
    %v153 = vshrl.u32 2475754826, %v150
    %v154 = vor.u32 %v152, %v153
    %v155 = vshll.u32 2475754826, %v149
    %v156 = vshrl.u32 2131351028, %v150
    %v157 = vor.u32 %v155, %v156
    %v158 = vshll.u32 2131351028, %v149
    %v159 = vshrl.u32 2102212464, %v150
    %v160 = vor.u32 %v158, %v159
    %v161 = vshll.u32 2102212464, %v149
    %v162 = vshrl.u32 920167782, %v150
    %v163 = vor.u32 %v161, %v162
    %v164 = vshll.u32 920167782, %v149
    %v165 = vshrl.u32 1326507024, %v150
    %v166 = vor.u32 %v164, %v165
    %vm167 = vcmp.lt.s32.totalorder %v148, 1
    %vm168 = vcmp.lt.s32.totalorder %v148, 2
    %vm169 = vcmp.lt.s32.totalorder %v148, 3
    %vm170 = vcmp.lt.s32.totalorder %v148, 4
    %v171 = vsel %vm167, %v151, %v154
    %v172 = vsel %vm170, %v160, 2102212464
    %v173 = vsel %vm169, %v157, %v172
    %v174 = vsel %vm168, %v171, %v173
    %v175 = vsel %vm167, %v154, %v157
    %v176 = vsel %vm170, %v163, 920167782
    %v177 = vsel %vm169, %v160, %v176
    %v178 = vsel %vm168, %v175, %v177
    %v179 = vsel %vm167, %v157, %v160
    %v180 = vsel %vm170, %v166, 1326507024
    %v181 = vsel %vm169, %v163, %v180
    %v182 = vsel %vm168, %v179, %v181
    %v183 = vshll.u32 %v143, 8
    %v184 = vmul.u32.u64.compose %v183, %v182
    %v185 = vextract.low.u32 %v184
    %v186 = vextract.high.u32 %v184
    %v187 = vmul.u32.u64.compose %v183, %v178
    %v188 = vextract.low.u32 %v187
    %v189 = vextract.high.u32 %v187
    %v190 = vmul.u32 %v183, %v174
    %v191 = vadd.s32 %v186, %v188
    %vm192 = vc.u32 %v186, %v188
    %v193 = vadd.s32 %v189, 1
    %v194 = vsel %vm192, %v193, %v189
    %v195 = vadd.s32 %v190, %v194
    %v196 = vadd.s32 %v195, 536870912
    %v197 = vshrl.u32 %v196, 30
    %v198 = vshll.u32 %v197, 30
    %v199 = vsub.s32 %v195, %v198
    %vm200 = vcmp.lt.s32.totalorder %v199, 0
    %v201 = vsub.s32 0, %v199
    %v202 = vsel %vm200, %v201, %v199
    %v203 = vclz %v202
    %v204 = vsub.s32 %v203, 2
    %vm205 = vcmp.gt.s32.totalorder 0, %v204
    %v206 = vsel %vm205, 0, %v204
    %v207 = vsub.s32 32, %v206
    %v208 = vshll.u32 %v199, %v206
    %v209 = vshrl.u32 %v191, %v207
    %v210 = vor.u32 %v208, %v209
    %v211 = vsub.s32 4294967266, %v206
    %v212 = vadd.s32 %v211, 127
    %v213 = vshll.u32 %v212, 23
    %v214 = vor.u32 4788187, %v213
    %v215 = vand.u32 2147483647, %v214
    %v217 = vcvt.s32.f32 %v210
    %v218 = vmul.f32 %v217, %v215
    %v219 = vxor.u32 %v218, 2147483648
    %v220 = vsel %vm137, %v219, %v218
    %v221 = vsub.s32 4, %v197
    %v222 = vsel %vm137, %v221, %v197
    %v223 = vsel %vm136, %v27, %v220
    %v224 = vsel %vm136, 0, %v222
    %v225 = vcosq.f32.pop %v223
    %v226 = vsinq.f32.pop %v223
    %vm227 = vweird.f32 %v27
    %v228 = vadd.s32 %v224, 3
    %v229 = vand.u32 %v228, 3
    %vm230 = vcmp.lt.s32.totalorder %v229, 2
    %vm231 = vcmp.eq.s32.totalorder %v229, 0
    %v232 = vxor.u32 %v226, 2147483648
    %v233 = vsel %vm231, %v225, %v232
    %vm234 = vcmp.eq.s32.totalorder %v229, 2
    %v235 = vxor.u32 %v225, 2147483648
    %v236 = vsel %vm234, %v235, %v226
    %v237 = vsel %vm230, %v233, %v236
    %v238 = vsel %vm227, nan, %v237
    %v239 = vmul.f32 %v134, %v23
    %v240 = vmul.f32 %v238, %v25
    %v241 = vsub.f32 %v239, %v240
    %v242 = vmul.f32 %v238, %v23
    %v243 = vmul.f32 %v134, %v25
    %v244 = vadd.f32 %v242, %v243
    %v245 = vand.u32 2147483647, %v241
    %v246 = vsub.f32 0.0, %v245
    %v247 = vmul.f32 %v246, 1.442695
    %v248 = vpow.pop %v247
    %v249 = vadd.f32 %v248, 1.0
    %v250 = vlog2.pop %v249
    %v251 = vmul.f32 %v250, 0.6931472
    %v252 = vmul.f32 -0.5, %v248
    %v253 = vadd.f32 %v252, 1.0
    %v254 = vmul.f32 %v253, %v248
    %v255 = vand.u32 2147483647, %v248
    %vm256 = vcmp.lt.f32.partialorder %v255, 0.0004427343
    %v257 = vsel %vm256, %v254, %v251
    %v258 = vsub.f32 0.0, %v241
    %v259 = vmax.f32 %v258, 0.0
    %v260 = vadd.f32 %v259, %v257
    %v261 = vmin.f32 %v260, 100.0
    %v262 = vmax.f32 %v241, 0.0
    %v263 = vadd.f32 %v262, %v257
    %v264 = vmin.f32 %v263, 100.0
    %v265 = vadd.f32 %v261, %v264
    %v266 = vmul.f32 %v265, 0.5
    %v267 = vand.u32 2147483647, %v244
    %v268 = vsub.f32 0.0, %v267
    %v269 = vmul.f32 %v268, 1.442695
    %v270 = vpow.pop %v269
    %v271 = vadd.f32 %v270, 1.0
    %v272 = vlog2.pop %v271
    %v273 = vmul.f32 %v272, 0.6931472
    %v274 = vmul.f32 -0.5, %v270
    %v275 = vadd.f32 %v274, 1.0
    %v276 = vmul.f32 %v275, %v270
    %v277 = vand.u32 2147483647, %v270
    %vm278 = vcmp.lt.f32.partialorder %v277, 0.0004427343
    %v279 = vsel %vm278, %v276, %v273
    %v280 = vsub.f32 0.0, %v244
    %v281 = vmax.f32 %v280, 0.0
    %v282 = vadd.f32 %v281, %v279
    %v283 = vmin.f32 %v282, 100.0
    %v284 = vmul.f32 %v29, %v266
    %v285 = vmul.f32 %v31, %v283
    %v286 = vadd.f32 %v284, %v285
    %287 = vst [vmem:[#allocation5] sm:$0xff] %v286
    // Predicated region
    $region10: #{tpu_custom_call.1} parent=1 // pred_check
      _
    $region11: #{tpu_custom_call.1} parent=1 // pred_check_branch
      %289 = sbr.rel (0) target = $region13
    $region12: #{tpu_custom_call.1} parent=1 // pred_region
      %s291 = ssub.s32 128, 128
      %292 = vsyncadd [#allocation4], %s291
      %s294 = sshll.u32 [#allocation5], 4
      %s295 = int_to_ptr.vmem [resolvable:$true] %s294
      %297 = dma.vmem_to_hbm [thread:$0]  %s295, 128, %s1, [#allocation4]
    $region13: #{tpu_custom_call.1} parent=1 // pred_fallthru
      _
    // Predicated region
    $region14: #{tpu_custom_call.1} parent=1 // pred_check
      _
    $region15: #{tpu_custom_call.1} parent=1 // pred_check_branch
      %299 = sbr.rel (0) target = $region17
    $region16: #{tpu_custom_call.1} parent=1 // pred_region
      %300 = dma.done [#allocation4], 128
    $region17: #{tpu_custom_call.1} parent=1 // pred_fallthru
      _
    %301 = vsyncpa [#allocation3], 1
    %302 = vsyncpa [#allocation4], 1

</llo_original>
